<compile_context>
chip_gen: v7x
topology: tpu7x:2x2x1
jax: 0.10.0
libtpu: 0.0.40
codegen_flags: <defaults>
</compile_context>

<pallas_src>
import functools

import jax
import jax.numpy as jnp
from jax.experimental import pallas as pl
from jax.experimental.pallas import tpu as pltpu


def _round_up(x, m):
    return ((x + m - 1) // m) * m


def _vmem_capacity_bytes():
    # 128 MiB per TC on v5e/v6e, 64 MiB on v7x. Conservative fallback if the
    # query is unavailable.
    try:
        return int(pltpu.get_tpu_info().vmem_capacity_bytes)
    except Exception:
        return 64 << 20


def _const_spec(shape, index_map):
    """BlockSpec for a grid-invariant operand: single-buffered (never re-DMA'd)."""
    if hasattr(pl, "Buffered"):
        try:
            return pl.BlockSpec(shape, index_map, pipeline_mode=pl.Buffered(1))
        except TypeError:
            pass
    return pl.BlockSpec(shape, index_map)


# ----------------------------------------------------------------------------
# Fast path: single-pass fused kernel (whole (C, HW) slab per batch element).
# ----------------------------------------------------------------------------
def _channel_att_fused_kernel(x_ref, w1_ref, b1_ref, w2_ref, b2_ref, o_ref):
    x = x_ref[0]                                                # (C, HW)
    hw = x.shape[1]

    # Global average pool over the spatial (lane) axis, f32 accumulation.
    pooled = jnp.sum(x.astype(jnp.float32), axis=1, keepdims=True) * (1.0 / hw)

    # FC1 + ReLU : (Cr, C) @ (C, 1) -> (Cr, 1)
    h = jnp.dot(w1_ref[...], pooled,
                preferred_element_type=jnp.float32) + b1_ref[...]
    h = jnp.maximum(h, 0.0)

    # FC2 + Sigmoid : (C, Cr) @ (Cr, 1) -> (C, 1)
    y = jax.nn.sigmoid(jnp.dot(w2_ref[...], h,
                               preferred_element_type=jnp.float32) + b2_ref[...])

    # Re-read x from VMEM for the rescale so the slab isn't kept live in vregs
    # across the FC sequence.
    o_ref[0] = (x_ref[0] * y).astype(o_ref.dtype)


# ----------------------------------------------------------------------------
# Tiled two-pass fallback.
# ----------------------------------------------------------------------------
def _pool_kernel(x_ref, sum_ref, *, hw_total):
    j = pl.program_id(1)

    @pl.when(j == 0)
    def _():
        sum_ref[...] = jnp.zeros_like(sum_ref)

    x = x_ref[0].astype(jnp.float32)                            # (C, hw_tile)
    hw_tile = x.shape[1]
    # Mask lanes past the logical HW extent (ragged last tile / lane padding)
    # so padded garbage never leaks into the pooled mean.
    lane = jax.lax.broadcasted_iota(jnp.int32, x.shape, 1) + j * hw_tile
    x = jnp.where(lane < hw_total, x, 0.0)
    sum_ref[0] += jnp.sum(x, axis=1, keepdims=True)


def _scale_kernel(x_ref, y_ref, o_ref):
    # x block (1, C, hw_tile), y block (1, C, 1) -> per-channel broadcast mul.
    o_ref[0] = (x_ref[0] * y_ref[0]).astype(o_ref.dtype)


# ----------------------------------------------------------------------------
# Wrapper.
# ----------------------------------------------------------------------------
def channel_att(x_nchw, w1, b1, w2, b2, *, force_tiled=False, hw_tile=None):
    """x_nchw: (B, C, H, W).  Weights in PyTorch nn.Linear layout:
    w1 (Cr, C), b1 (Cr,), w2 (C, Cr), b2 (C,)."""
    B, C, H, W = x_nchw.shape
    Cr = w1.shape[0]
    HW = H * W
    itemsize = x_nchw.dtype.itemsize

    # Free reshapes (no data movement): channels on sublanes, HW on lanes.
    x = x_nchw.reshape(B, C, HW)
    b1c = b1.reshape(Cr, 1).astype(jnp.float32)
    b2c = b2.reshape(C, 1).astype(jnp.float32)

    # Padded-footprint VMEM accounting (lane = 128, sublane = 8 for 32-bit).
    sub = 8 if itemsize == 4 else 16
    c_pad = _round_up(C, sub)
    cr_pad = _round_up(Cr, sub)
    hw_pad = _round_up(HW, 128)
    slab_bytes = c_pad * hw_pad * itemsize
    weight_bytes = (cr_pad * _round_up(C, 128) + c_pad * _round_up(Cr, 128)
                    + cr_pad * 128 + c_pad * 128) * 4
    # input + output slab, double-buffered; weights single-buffered; + slack.
    fused_needed = 4 * slab_bytes + weight_bytes + (2 << 20)

    cap = int(_vmem_capacity_bytes() * 0.7)   # headroom for compiler scratch

    if not force_tiled and fused_needed <= cap:
        # ---------------- single-pass fused fast path ----------------
        vmem_limit = int(min(max(fused_needed, 8 << 20), cap))
        out = pl.pallas_call(
            _channel_att_fused_kernel,
            out_shape=jax.ShapeDtypeStruct((B, C, HW), x.dtype),
            grid=(B,),
            in_specs=[
                pl.BlockSpec((1, C, HW), lambda b: (b, 0, 0)),
                _const_spec((Cr, C), lambda b: (0, 0)),
                _const_spec((Cr, 1), lambda b: (0, 0)),
                _const_spec((C, Cr), lambda b: (0, 0)),
                _const_spec((C, 1), lambda b: (0, 0)),
            ],
            out_specs=pl.BlockSpec((1, C, HW), lambda b: (b, 0, 0)),
            compiler_params=pltpu.CompilerParams(
                dimension_semantics=("parallel",),
                vmem_limit_bytes=vmem_limit),
        )(x, w1.astype(jnp.float32), b1c, w2.astype(jnp.float32), b2c)
        return out.reshape(B, C, H, W)

    # ---------------- tiled two-pass fallback ----------------
    if hw_tile is None:
        target = 2 << 20                     # ~2 MiB x-block -> ~85% HBM roofline
        hw_tile = max(512, (target // max(c_pad * itemsize, 1)) // 128 * 128)
    hw_tile = max(128, _round_up(min(hw_tile, hw_pad), 128))
    n_hw = pl.cdiv(HW, hw_tile)
    tile_bytes = c_pad * hw_tile * itemsize

    # Pass 1: HW-tiled global sum pool (reduction axis last, "arbitrary").
    pool_vmem = int(min(max(2 * tile_bytes + (1 << 20), 8 << 20), cap))
    sums = pl.pallas_call(
        functools.partial(_pool_kernel, hw_total=HW),
        out_shape=jax.ShapeDtypeStruct((B, C, 1), jnp.float32),
        grid=(B, n_hw),
        in_specs=[pl.BlockSpec((1, C, hw_tile), lambda b, j: (b, 0, j))],
        out_specs=pl.BlockSpec((1, C, 1), lambda b, j: (b, 0, 0)),
        compiler_params=pltpu.CompilerParams(
            dimension_semantics=("parallel", "arbitrary"),
            vmem_limit_bytes=pool_vmem),
    )(x)

    # Tiny FC bottleneck, batched over B (one properly shaped matmul each,
    # instead of B width-1 MXU matmuls). FLOPs are negligible; plain XLA.
    pooled = sums[:, :, 0] * (1.0 / HW)                               # (B, C)
    h = jnp.maximum(pooled @ w1.T.astype(jnp.float32) + b1, 0.0)      # (B, Cr)
    y = jax.nn.sigmoid(h @ w2.T.astype(jnp.float32) + b2)             # (B, C)
    y = y.reshape(B, C, 1)

    # Pass 2: HW-tiled rescale; both grid axes parallel (v7x megacore-friendly).
    scale_vmem = int(min(max(4 * tile_bytes + (1 << 20), 8 << 20), cap))
    out = pl.pallas_call(
        _scale_kernel,
        out_shape=jax.ShapeDtypeStruct((B, C, HW), x.dtype),
        grid=(B, n_hw),
        in_specs=[
            pl.BlockSpec((1, C, hw_tile), lambda b, j: (b, 0, j)),
            pl.BlockSpec((1, C, 1), lambda b, j: (b, 0, 0)),
        ],
        out_specs=pl.BlockSpec((1, C, hw_tile), lambda b, j: (b, 0, j)),
        compiler_params=pltpu.CompilerParams(
            dimension_semantics=("parallel", "parallel"),
            vmem_limit_bytes=scale_vmem),
    )(x, y)
    return out.reshape(B, C, H, W)


def channel_att_ref(x_nchw, w1, b1, w2, b2):
    """Pure-JAX reference mirroring the PyTorch semantics (nn.Linear layout)."""
    pooled = jnp.mean(x_nchw, axis=(2, 3))                     # (B, C)
    h = jnp.maximum(pooled @ w1.T + b1, 0.0)                   # (B, Cr)
    y = jax.nn.sigmoid(h @ w2.T + b2)                          # (B, C)
    return x_nchw * y[:, :, None, None]


if __name__ == "__main__":
    key = jax.random.PRNGKey(0)
    kx, k1, k2, k3, k4, kx2 = jax.random.split(key, 6)

    B, C, H, W = 2, 4, 16, 16
    reduction = 2
    Cr = C // reduction

    x = jax.random.normal(kx, (B, C, H, W), dtype=jnp.float32)

    # nn.Linear-style init (uniform +/- 1/sqrt(fan_in)), PyTorch (out, in) layout.
    lim1 = 1.0 / jnp.sqrt(jnp.float32(C))
    w1 = jax.random.uniform(k1, (Cr, C), jnp.float32, -lim1, lim1)
    b1 = jax.random.uniform(k2, (Cr,), jnp.float32, -lim1, lim1)
    lim2 = 1.0 / jnp.sqrt(jnp.float32(Cr))
    w2 = jax.random.uniform(k3, (C, Cr), jnp.float32, -lim2, lim2)
    b2 = jax.random.uniform(k4, (C,), jnp.float32, -lim2, lim2)

    ref = channel_att_ref(x, w1, b1, w2, b2)

    # Fast path: single-pass fused kernel.
    out = jax.block_until_ready(channel_att(x, w1, b1, w2, b2))
    assert out.shape == (B, C, H, W)
    assert jnp.allclose(out, ref, atol=1e-5, rtol=1e-5)

    # Tiled two-pass fallback (forced, 128-lane tiles to exercise accumulation).
    out_t = jax.block_until_ready(
        channel_att(x, w1, b1, w2, b2, force_tiled=True, hw_tile=128))
    assert jnp.allclose(out_t, ref, atol=1e-5, rtol=1e-5)

    # Non-multiple-of-128 spatial size (7x7): exercises lane-pad masking in the
    # pooling pass and ragged-edge stores in the rescale pass.
    x2 = jax.random.normal(kx2, (B, C, 7, 7), dtype=jnp.float32)
    ref2 = channel_att_ref(x2, w1, b1, w2, b2)
    out2 = jax.block_until_ready(channel_att(x2, w1, b1, w2, b2))
    assert jnp.allclose(out2, ref2, atol=1e-5, rtol=1e-5)
    out2_t = jax.block_until_ready(
        channel_att(x2, w1, b1, w2, b2, force_tiled=True))
    assert jnp.allclose(out2_t, ref2, atol=1e-5, rtol=1e-5)

    print("KERNEL_OK")
</pallas_src>

<mosaic_0001>
module attributes {stable_mosaic.version = 11 : i64} {
  func.func @_channel_att_fused_kernel(%arg0: i32, %arg1: memref<1x4x256xf32, #tpu.memory_space<vmem>>, %arg2: memref<2x4xf32, #tpu.memory_space<vmem>>, %arg3: memref<2x1xf32, #tpu.memory_space<vmem>>, %arg4: memref<4x2xf32, #tpu.memory_space<vmem>>, %arg5: memref<4x1xf32, #tpu.memory_space<vmem>>, %arg6: memref<1x4x256xf32, #tpu.memory_space<vmem>>) attributes {dimension_semantics = [#tpu.dimension_semantics<parallel>], iteration_bounds = array<i64: 2>, scalar_prefetch = 0 : i64, scratch_operands = 0 : i64, tpu.core_type = #tpu.core_type<tc>, window_params = [{transform_indices = @transform_0, window_bounds = array<i64: 1, 4, 256>}, {pipeline_mode = #tpu.pipeline_mode<synchronous>, transform_indices = @transform_1, window_bounds = array<i64: 2, 4>}, {pipeline_mode = #tpu.pipeline_mode<synchronous>, transform_indices = @transform_2, window_bounds = array<i64: 2, 1>}, {pipeline_mode = #tpu.pipeline_mode<synchronous>, transform_indices = @transform_3, window_bounds = array<i64: 4, 2>}, {pipeline_mode = #tpu.pipeline_mode<synchronous>, transform_indices = @transform_4, window_bounds = array<i64: 4, 1>}, {transform_indices = @transform_5, window_bounds = array<i64: 1, 4, 256>}]} {
    %c0 = arith.constant 0 : index
    %c0_0 = arith.constant 0 : index
    %c0_1 = arith.constant 0 : index
    %0 = vector.load %arg1[%c0, %c0_0, %c0_1] : memref<1x4x256xf32, #tpu.memory_space<vmem>>, vector<1x4x256xf32>
    %1 = vector.shape_cast %0 : vector<1x4x256xf32> to vector<4x256xf32>
    %cst = arith.constant dense<0.000000e+00> : vector<4xf32>
    %2 = vector.multi_reduction <add>, %1, %cst [1] : vector<4x256xf32> to vector<4xf32>
    %3 = vector.shape_cast %2 : vector<4xf32> to vector<4x1xf32>
    %cst_2 = arith.constant 3.906250e-03 : f32
    %4 = vector.broadcast %cst_2 : f32 to vector<4x1xf32>
    %5 = arith.mulf %3, %4 : vector<4x1xf32>
    %c0_3 = arith.constant 0 : index
    %c0_4 = arith.constant 0 : index
    %6 = vector.load %arg2[%c0_3, %c0_4] : memref<2x4xf32, #tpu.memory_space<vmem>>, vector<2x4xf32>
    %cst_5 = arith.constant dense<0.000000e+00> : vector<2x1xf32>
    %7 = tpu.matmul %6, %5, %cst_5 {dimension_numbers = #tpu.dot_dimension_numbers<[1], [0], [0], [1], [0, 0, 1, 1], [], []>} : vector<2x4xf32>, vector<4x1xf32>, vector<2x1xf32> -> vector<2x1xf32>
    %c0_6 = arith.constant 0 : index
    %c0_7 = arith.constant 0 : index
    %8 = vector.load %arg3[%c0_6, %c0_7] : memref<2x1xf32, #tpu.memory_space<vmem>>, vector<2x1xf32>
    %9 = arith.addf %7, %8 : vector<2x1xf32>
    %cst_8 = arith.constant 0.000000e+00 : f32
    %10 = vector.broadcast %cst_8 : f32 to vector<2x1xf32>
    %11 = arith.maximumf %9, %10 : vector<2x1xf32>
    %c0_9 = arith.constant 0 : index
    %c0_10 = arith.constant 0 : index
    %12 = vector.load %arg4[%c0_9, %c0_10] : memref<4x2xf32, #tpu.memory_space<vmem>>, vector<4x2xf32>
    %cst_11 = arith.constant dense<0.000000e+00> : vector<4x1xf32>
    %13 = tpu.matmul %12, %11, %cst_11 {dimension_numbers = #tpu.dot_dimension_numbers<[1], [0], [0], [1], [0, 0, 1, 1], [], []>} : vector<4x2xf32>, vector<2x1xf32>, vector<4x1xf32> -> vector<4x1xf32>
    %c0_12 = arith.constant 0 : index
    %c0_13 = arith.constant 0 : index
    %14 = vector.load %arg5[%c0_12, %c0_13] : memref<4x1xf32, #tpu.memory_space<vmem>>, vector<4x1xf32>
    %15 = arith.addf %13, %14 : vector<4x1xf32>
    %16 = arith.negf %15 : vector<4x1xf32>
    %17 = math.exp %16 : vector<4x1xf32>
    %cst_14 = arith.constant 1.000000e+00 : f32
    %18 = vector.broadcast %cst_14 : f32 to vector<4x1xf32>
    %19 = arith.addf %18, %17 : vector<4x1xf32>
    %20 = arith.divf %18, %19 : vector<4x1xf32>
    %c0_15 = arith.constant 0 : index
    %c0_16 = arith.constant 0 : index
    %c0_17 = arith.constant 0 : index
    %21 = vector.load %arg1[%c0_15, %c0_16, %c0_17] : memref<1x4x256xf32, #tpu.memory_space<vmem>>, vector<1x4x256xf32>
    %22 = vector.shape_cast %21 : vector<1x4x256xf32> to vector<4x256xf32>
    %23 = vector.broadcast %20 : vector<4x1xf32> to vector<4x256xf32>
    %24 = arith.mulf %22, %23 : vector<4x256xf32>
    %c0_18 = arith.constant 0 : index
    %c0_19 = arith.constant 0 : index
    %c0_20 = arith.constant 0 : index
    %25 = vector.load %arg6[%c0_18, %c0_19, %c0_20] : memref<1x4x256xf32, #tpu.memory_space<vmem>>, vector<1x4x256xf32>
    %26 = vector.shape_cast %25 : vector<1x4x256xf32> to vector<4x256xf32>
    %27 = vector.shape_cast %24 : vector<4x256xf32> to vector<1x4x256xf32>
    tpu.vector_store %arg6[%c0_18, %c0_19, %c0_20], %27 {strides = array<i32>} : memref<1x4x256xf32, #tpu.memory_space<vmem>>, vector<1x4x256xf32>,
    return
  }
  func.func @transform_0(%arg0: i32) -> (i32, i32, i32) {
    %c0_i32 = arith.constant 0 : i32
    %c0_i32_0 = arith.constant 0 : i32
    %c0_i32_1 = arith.constant 0 : i32
    return %arg0, %c0_i32, %c0_i32_0 : i32, i32, i32
  }
  func.func @transform_1(%arg0: i32) -> (i32, i32) {
    %c0_i32 = arith.constant 0 : i32
    %c0_i32_0 = arith.constant 0 : i32
    %c0_i32_1 = arith.constant 0 : i32
    return %c0_i32, %c0_i32_0 : i32, i32
  }
  func.func @transform_2(%arg0: i32) -> (i32, i32) {
    %c0_i32 = arith.constant 0 : i32
    %c0_i32_0 = arith.constant 0 : i32
    %c0_i32_1 = arith.constant 0 : i32
    return %c0_i32, %c0_i32_0 : i32, i32
  }
  func.func @transform_3(%arg0: i32) -> (i32, i32) {
    %c0_i32 = arith.constant 0 : i32
    %c0_i32_0 = arith.constant 0 : i32
    %c0_i32_1 = arith.constant 0 : i32
    return %c0_i32, %c0_i32_0 : i32, i32
  }
  func.func @transform_4(%arg0: i32) -> (i32, i32) {
    %c0_i32 = arith.constant 0 : i32
    %c0_i32_0 = arith.constant 0 : i32
    %c0_i32_1 = arith.constant 0 : i32
    return %c0_i32, %c0_i32_0 : i32, i32
  }
  func.func @transform_5(%arg0: i32) -> (i32, i32, i32) {
    %c0_i32 = arith.constant 0 : i32
    %c0_i32_0 = arith.constant 0 : i32
    %c0_i32_1 = arith.constant 0 : i32
    return %arg0, %c0_i32, %c0_i32_0 : i32, i32, i32
  }
}

</mosaic_0001>

<llo_original>
// kernel: tpu_custom_call.1
$region0: #{tpu_custom_call.1}
  #allocation0 [shape = 'u32[]', space=smem, size = 0x4, offset = 0x4, fixed_abs, tag = 'smem constant byte address 0x4 - core index']
  #allocation1 [shape = 'u32[144,128]{1,0:T(1,128)}', space=vmem, size = 0x12000, scoped, tag = 'internal scratch']
  %s0 = inlined_call_operand.hbm [shape: f32[2,4,256], index: 0, kind: input, shape index: {}]
  %s1 = inlined_call_operand.vmem [shape: f32[2,4], index: 1, kind: input, shape index: {}]
  %s2 = inlined_call_operand.vmem [shape: f32[2,1], index: 2, kind: input, shape index: {}]
  %s3 = inlined_call_operand.vmem [shape: f32[4,2], index: 3, kind: input, shape index: {}]
  %s4 = inlined_call_operand.vmem [shape: f32[4,1], index: 4, kind: input, shape index: {}]
  %s5 = inlined_call_operand.hbm [shape: f32[2,4,256], index: 5, kind: output, shape index: {}]
  %s6 = sld [smem:[#allocation0]]
  $region57: #{tpu_custom_call.1} parent=0
    _
  %s8 = ssub.s32 1, %s6
  %s9 = scalar_select 0, %s8, %s6
  $region1: #{tpu_custom_call.1} parent=0
    #allocation2 [shape = 'u8[8192]{0}', space=vmem, size = 0x2000, scoped, tag = 'input window, operand 0']
    #allocation3 [shape = 's32[2]{0}', space=sflag, size = 0x8, scoped, tag = 'scoped memory for tpu_custom_call.1']
    #allocation4 [shape = 's32[2]{0}', space=sflag, size = 0x8, scoped, tag = 'scoped memory for tpu_custom_call.1']
    #allocation5 [shape = 'u8[8192]{0}', space=vmem, size = 0x2000, scoped, tag = 'output window, operand 0']
    %10 = vsyncpa [#allocation3], 0
    %s11 = scalar_lea.sflag [#allocation3], 1
    %12 = vsyncpa %s11, 0
    %13 = vsyncpa [#allocation4], 0
    %s14 = scalar_lea.sflag [#allocation4], 1
    %15 = vsyncpa %s14, 0
    loop: start=0, step=1, limit=4
    $region2: #{tpu_custom_call.1} parent=1 // loop_pre_header
      _
    $region3: #{tpu_custom_call.1} parent=1 // loop_header
      %s17 = sphi 0, %s21
      %p18 = scmp.ge.s32.totalorder %s17, 4
      %s27 = sphi 0, %s29
      %s30 = sphi 0, %s27
      %s31 = sphi 0, %s30
      %s47 = sphi 0, %s31
      %s51 = sphi 0, %s51
      %s53 = sphi 0, %s51
      %s54 = sphi 0, %s53
      %s68 = sphi 0, %s54
      %s72 = sphi 0, %s72
      %s74 = sphi 0, %s72
      %s75 = sphi 0, %s74
      %s89 = sphi 0, %s75
      %s93 = sphi 0, %s93
      %s95 = sphi 0, %s93
      %s96 = sphi 0, %s95
      %s110 = sphi 0, %s96
      %s114 = sphi 0, %s114
      %s116 = sphi 0, %s114
      %s117 = sphi 0, %s116
      %s131 = sphi 0, %s117
      %s137 = sphi 0, %s139
      %s140 = sphi 0, %s137
      %s141 = sphi 0, %s140
      %s157 = sphi 0, %s141
    $region4: #{tpu_custom_call.1} parent=1 // loop_header_branch
      %20 = sbr.rel (%p18) target = $region8
    $region5: #{tpu_custom_call.1} parent=1 // loop_body
      %s22 = ssub.s32 %s17, 1
      %s23 = ssub.s32 %s17, 2
      %s24 = sadd.s32 %s17, 1
      %s25 = ssub.s32 %s17, %s24
      %p26 = scmp.eq.s32.totalorder %s25, 0
      %s28 = sadd.s32 %s27, 1
      %s29 = scalar_select %p26, %s27, %s28
      %p32 = pneg %p26
      %p33 = scmp.eq.s32.totalorder %s17, 1
      %p34 = por %p32, %p33
      %p35 = scmp.ne.s32.totalorder %s27, %s30
      %p36 = scmp.eq.s32.totalorder %s17, 0
      %p37 = por %p35, %p36
      %p38 = scmp.ne.s32.totalorder %s27, %s30
      %p39 = scmp.eq.s32.totalorder %s22, 1
      %p40 = por %p38, %p39
      %p41 = scmp.ne.s32.totalorder %s30, %s31
      %p42 = scmp.eq.s32.totalorder %s22, 0
      %p43 = por %p41, %p42
      %p44 = scmp.ne.s32.totalorder %s30, %s31
      %p45 = scmp.eq.s32.totalorder %s23, 1
      %p46 = por %p44, %p45
      %p48 = scmp.ne.s32.totalorder %s31, %s47
      %p49 = scmp.eq.s32.totalorder %s23, 0
      %p50 = por %p48, %p49
      %s52 = sadd.s32 %s51, 1
      %p55 = scmp.eq.s32.totalorder %s17, 1
      %p56 = scmp.ne.s32.totalorder %s51, %s53
      %p57 = scmp.eq.s32.totalorder %s17, 0
      %p58 = por %p56, %p57
      %p59 = scmp.ne.s32.totalorder %s51, %s53
      %p60 = scmp.eq.s32.totalorder %s22, 1
      %p61 = por %p59, %p60
      %p62 = scmp.ne.s32.totalorder %s53, %s54
      %p63 = scmp.eq.s32.totalorder %s22, 0
      %p64 = por %p62, %p63
      %p65 = scmp.ne.s32.totalorder %s53, %s54
      %p66 = scmp.eq.s32.totalorder %s23, 1
      %p67 = por %p65, %p66
      %p69 = scmp.ne.s32.totalorder %s54, %s68
      %p70 = scmp.eq.s32.totalorder %s23, 0
      %p71 = por %p69, %p70
      %s73 = sadd.s32 %s72, 1
      %p76 = scmp.eq.s32.totalorder %s17, 1
      %p77 = scmp.ne.s32.totalorder %s72, %s74
      %p78 = scmp.eq.s32.totalorder %s17, 0
      %p79 = por %p77, %p78
      %p80 = scmp.ne.s32.totalorder %s72, %s74
      %p81 = scmp.eq.s32.totalorder %s22, 1
      %p82 = por %p80, %p81
      %p83 = scmp.ne.s32.totalorder %s74, %s75
      %p84 = scmp.eq.s32.totalorder %s22, 0
      %p85 = por %p83, %p84
      %p86 = scmp.ne.s32.totalorder %s74, %s75
      %p87 = scmp.eq.s32.totalorder %s23, 1
      %p88 = por %p86, %p87
      %p90 = scmp.ne.s32.totalorder %s75, %s89
      %p91 = scmp.eq.s32.totalorder %s23, 0
      %p92 = por %p90, %p91
      %s94 = sadd.s32 %s93, 1
      %p97 = scmp.eq.s32.totalorder %s17, 1
      %p98 = scmp.ne.s32.totalorder %s93, %s95
      %p99 = scmp.eq.s32.totalorder %s17, 0
      %p100 = por %p98, %p99
      %p101 = scmp.ne.s32.totalorder %s93, %s95
      %p102 = scmp.eq.s32.totalorder %s22, 1
      %p103 = por %p101, %p102
      %p104 = scmp.ne.s32.totalorder %s95, %s96
      %p105 = scmp.eq.s32.totalorder %s22, 0
      %p106 = por %p104, %p105
      %p107 = scmp.ne.s32.totalorder %s95, %s96
      %p108 = scmp.eq.s32.totalorder %s23, 1
      %p109 = por %p107, %p108
      %p111 = scmp.ne.s32.totalorder %s96, %s110
      %p112 = scmp.eq.s32.totalorder %s23, 0
      %p113 = por %p111, %p112
      %s115 = sadd.s32 %s114, 1
      %p118 = scmp.eq.s32.totalorder %s17, 1
      %p119 = scmp.ne.s32.totalorder %s114, %s116
      %p120 = scmp.eq.s32.totalorder %s17, 0
      %p121 = por %p119, %p120
      %p122 = scmp.ne.s32.totalorder %s114, %s116
      %p123 = scmp.eq.s32.totalorder %s22, 1
      %p124 = por %p122, %p123
      %p125 = scmp.ne.s32.totalorder %s116, %s117
      %p126 = scmp.eq.s32.totalorder %s22, 0
      %p127 = por %p125, %p126
      %p128 = scmp.ne.s32.totalorder %s116, %s117
      %p129 = scmp.eq.s32.totalorder %s23, 1
      %p130 = por %p128, %p129
      %p132 = scmp.ne.s32.totalorder %s117, %s131
      %p133 = scmp.eq.s32.totalorder %s23, 0
      %p134 = por %p132, %p133
      %s135 = ssub.s32 %s17, %s24
      %p136 = scmp.eq.s32.totalorder %s135, 0
      %s138 = sadd.s32 %s137, 1
      %s139 = scalar_select %p136, %s137, %s138
      %p142 = pneg %p136
      %p143 = scmp.eq.s32.totalorder %s17, 1
      %p144 = por %p142, %p143
      %p145 = scmp.ne.s32.totalorder %s137, %s140
      %p146 = scmp.eq.s32.totalorder %s17, 0
      %p147 = por %p145, %p146
      %p148 = scmp.ne.s32.totalorder %s137, %s140
      %p149 = scmp.eq.s32.totalorder %s22, 1
      %p150 = por %p148, %p149
      %p151 = scmp.ne.s32.totalorder %s140, %s141
      %p152 = scmp.eq.s32.totalorder %s22, 0
      %p153 = por %p151, %p152
      %p154 = scmp.ne.s32.totalorder %s140, %s141
      %p155 = scmp.eq.s32.totalorder %s23, 1
      %p156 = por %p154, %p155
      %p158 = scmp.ne.s32.totalorder %s141, %s157
      %p159 = scmp.eq.s32.totalorder %s23, 0
      %p160 = por %p158, %p159
      %p161 = scmp.le.s32.totalorder 1, %s17
      %p162 = scmp.lt.s32.totalorder %s17, 3
      %p163 = pnand %p161, %p162
      %p164 = pneg %p163
      // Predicated region
      $region9: #{tpu_custom_call.1} parent=5 // pred_check
        _
      $region10: #{tpu_custom_call.1} parent=5 // pred_check_branch
        %166 = sbr.rel (%p163) target = $region12
      $region11: #{tpu_custom_call.1} parent=5 // pred_region
        %s167 = ssub.s32 %s17, 1
        // Predicated region
        $region13: #{tpu_custom_call.1} parent=11 // pred_check
          %p168 = pneg %p64
        $region14: #{tpu_custom_call.1} parent=11 // pred_check_branch
          %170 = sbr.rel (%p168) target = $region16
        $region15: #{tpu_custom_call.1} parent=11 // pred_region
          _
        $region16: #{tpu_custom_call.1} parent=11 // pred_fallthru
          _
        // Predicated region
        $region17: #{tpu_custom_call.1} parent=11 // pred_check
          %p171 = pneg %p85
        $region18: #{tpu_custom_call.1} parent=11 // pred_check_branch
          %173 = sbr.rel (%p171) target = $region20
        $region19: #{tpu_custom_call.1} parent=11 // pred_region
          _
        $region20: #{tpu_custom_call.1} parent=11 // pred_fallthru
          _
        // Predicated region
        $region21: #{tpu_custom_call.1} parent=11 // pred_check
          %p174 = pneg %p106
        $region22: #{tpu_custom_call.1} parent=11 // pred_check_branch
          %176 = sbr.rel (%p174) target = $region24
        $region23: #{tpu_custom_call.1} parent=11 // pred_region
          _
        $region24: #{tpu_custom_call.1} parent=11 // pred_fallthru
          _
        // Predicated region
        $region25: #{tpu_custom_call.1} parent=11 // pred_check
          %p177 = pneg %p127
        $region26: #{tpu_custom_call.1} parent=11 // pred_check_branch
          %179 = sbr.rel (%p177) target = $region28
        $region27: #{tpu_custom_call.1} parent=11 // pred_region
          _
        $region28: #{tpu_custom_call.1} parent=11 // pred_fallthru
          _
      $region12: #{tpu_custom_call.1} parent=5 // pred_fallthru
        _
      %p180 = scmp.lt.s32.totalorder %s17, 2
      // Predicated region
      $region29: #{tpu_custom_call.1} parent=5 // pred_check
        %p181 = pneg %p180
      $region30: #{tpu_custom_call.1} parent=5 // pred_check_branch
        %183 = sbr.rel (%p181) target = $region32
      $region31: #{tpu_custom_call.1} parent=5 // pred_region
        // Predicated region
        $region33: #{tpu_custom_call.1} parent=31 // pred_check
          %p184 = pneg %p37
        $region34: #{tpu_custom_call.1} parent=31 // pred_check_branch
          %186 = sbr.rel (%p184) target = $region36
        $region35: #{tpu_custom_call.1} parent=31 // pred_region
          %s187 = sand.u32 %s27, 1
          %s188 = scalar_lea.sflag [#allocation3], %s187
          %s189 = sand.u32 %s27, 1
          %s190 = smul.addr %s189, 8
          %s191 = scalar_lea.vmem [#allocation2], %s190
          %s193 = ssub.s32 128, 128
          %194 = vsyncadd %s188, %s193
          %s195 = smul.addr %s17, 2
          %s196 = smul.addr %s195, 64
          %s197 = scalar_lea.hbm %s0, %s196
          %s199 = sshll.u32 %s191, 4
          %s200 = int_to_ptr.vmem [resolvable:$true] %s199
          %202 = dma.hbm_to_vmem [thread:$0]  %s197, 128, %s200, %s188
        $region36: #{tpu_custom_call.1} parent=31 // pred_fallthru
          _
      $region32: #{tpu_custom_call.1} parent=5 // pred_fallthru
        _
      %p203 = scmp.le.s32.totalorder 1, %s17
      %p204 = scmp.lt.s32.totalorder %s17, 3
      %p205 = pnand %p203, %p204
      %p206 = pneg %p205
      // Predicated region
      $region37: #{tpu_custom_call.1} parent=5 // pred_check
        _
      $region38: #{tpu_custom_call.1} parent=5 // pred_check_branch
        %208 = sbr.rel (%p205) target = $region40
      $region39: #{tpu_custom_call.1} parent=5 // pred_region
        %s209 = ssub.s32 %s17, 1
        %s210 = sand.u32 %s30, 1
        %s211 = scalar_lea.sflag [#allocation3], %s210
        %s212 = sand.u32 %s30, 1
        %s213 = smul.addr %s212, 8
        %s214 = scalar_lea.vmem [#allocation2], %s213
        // Predicated region
        $region41: #{tpu_custom_call.1} parent=39 // pred_check
          %p215 = pneg %p43
        $region42: #{tpu_custom_call.1} parent=39 // pred_check_branch
          %217 = sbr.rel (%p215) target = $region44
        $region43: #{tpu_custom_call.1} parent=39 // pred_region
          %218 = dma.done %s211, 128
        $region44: #{tpu_custom_call.1} parent=39 // pred_fallthru
          _
        %s219 = sand.u32 %s30, 1
        %s220 = scalar_lea.sflag [#allocation3], %s219
        %s221 = sand.u32 %s30, 1
        %s222 = smul.addr %s221, 8
        %s223 = scalar_lea.vmem [#allocation2], %s222
        %p224 = pneg %p43
        %p225 = pneg %p40
        %p226 = pneg %p64
        %p227 = pneg %p61
        %p228 = pneg %p85
        %p229 = pneg %p82
        %p230 = pneg %p106
        %p231 = pneg %p103
        %p232 = pneg %p127
        %p233 = pneg %p124
        %p234 = pneg %p153
        %p235 = pneg %p150
        %s236 = sand.u32 %s140, 1
        %s237 = scalar_lea.sflag [#allocation4], %s236
        %s238 = sand.u32 %s140, 1
        %s239 = smul.addr %s238, 8
        %s240 = scalar_lea.vmem [#allocation5], %s239
        %v241 = vld [vmem:[%s214] sm:$0xff]
        %v243 = vcombine.high %v241, %v241
        %vm245 = vcmask 1043456
        %v246 = vsel %vm245, %v241, 0.0
        %v247 = vsel %vm245, %v243, 0.0
        %v248 = vadd.f32 %v246, %v247
        %249 = vadd.xlane.f32.xlu0 %v248
        %v250 = vpop.xlane.xlu0 %249
        %v251 = vmul.f32 %v250, 0.00390625
        %v252 = vld [vmem:[%s1] sm:$0x3]
        %v253 = vld [vmem:[%s2] sm:$0x3]
        %vm254 = vcmask 31744
        %v256 = vsel %vm254, %v252, 0
        %v259 = vsel %vm245, %v251, 0
        %261 = vmatprep.subr.mxu0 0.0
        %262 = vmatpush1.msra.mxu0 %v259
        %263 = vmatprep.subr.mxu0 0.0
        %264 = vmatpush1.msra.mxu0 0.0
        %265 = vmatprep.subr.mxu0 0.0
        %266 = vmatpush1.msra.mxu0 0.0
        %267 = vmatprep.subr.mxu0 0.0
        %268 = vmatpush1.msra.mxu0 0.0
        %269 = vmatprep.subr.mxu0 0.0
        %270 = vmatpush1.msra.mxu0 0.0
        %271 = vmatprep.subr.mxu0 0.0
        %272 = vmatpush1.msra.mxu0 0.0
        %273 = vmatprep.subr.mxu0 0.0
        %274 = vmatpush1.msra.mxu0 0.0
        %275 = vmatprep.subr.mxu0 0.0
        %276 = vmatpush1.msra.mxu0 0.0
        %277 = vmatprep.subr.mxu0 0.0
        %278 = vmatpush1.msra.mxu0 0.0
        %279 = vmatprep.subr.mxu0 0.0
        %280 = vmatpush1.msra.mxu0 0.0
        %281 = vmatprep.subr.mxu0 0.0
        %282 = vmatpush1.msra.mxu0 0.0
        %283 = vmatprep.subr.mxu0 0.0
        %284 = vmatpush1.msra.mxu0 0.0
        %285 = vmatprep.subr.mxu0 0.0
        %286 = vmatpush1.msra.mxu0 0.0
        %287 = vmatprep.subr.mxu0 0.0
        %288 = vmatpush1.msra.mxu0 0.0
        %289 = vmatprep.subr.mxu0 0.0
        %290 = vmatpush1.msra.mxu0 0.0
        %291 = vmatprep.subr.mxu0 0.0
        %292 = vmatpush1.msra.mxu0 0.0
        %293 = vmatprep.subr.mxu0 0.0
        %294 = vmatpush1.msra.mxu0 0.0
        %295 = vmatprep.subr.mxu0 0.0
        %296 = vmatpush1.msra.mxu0 0.0
        %297 = vmatprep.subr.mxu0 0.0
        %298 = vmatpush1.msra.mxu0 0.0
        %299 = vmatprep.subr.mxu0 0.0
        %300 = vmatpush1.msra.mxu0 0.0
        %301 = vmatprep.subr.mxu0 0.0
        %302 = vmatpush1.msra.mxu0 0.0
        %303 = vmatprep.subr.mxu0 0.0
        %304 = vmatpush1.msra.mxu0 0.0
        %305 = vmatprep.subr.mxu0 0.0
        %306 = vmatpush1.msra.mxu0 0.0
        %307 = vmatprep.subr.mxu0 0.0
        %308 = vmatpush1.msra.mxu0 0.0
        %309 = vmatprep.subr.mxu0 0.0
        %310 = vmatpush1.msra.mxu0 0.0
        %311 = vmatprep.subr.mxu0 0.0
        %312 = vmatpush1.msra.mxu0 0.0
        %313 = vmatprep.subr.mxu0 0.0
        %314 = vmatpush1.msra.mxu0 0.0
        %315 = vmatprep.subr.mxu0 0.0
        %316 = vmatpush1.msra.mxu0 0.0
        %317 = vmatprep.subr.mxu0 0.0
        %318 = vmatpush1.msra.mxu0 0.0
        %319 = vmatprep.subr.mxu0 0.0
        %320 = vmatpush1.msra.mxu0 0.0
        %321 = vmatprep.subr.mxu0 0.0
        %322 = vmatpush1.msra.mxu0 0.0
        %323 = vmatprep.subr.mxu0 0.0
        %324 = vmatpush1.msra.mxu0 0.0
        %325 = vmatprep.mubr.f32.mxu0 0.0
        %326 = vmatmul.mubr.f32.gmra.mrb[0].mxu0 %v256
        %v327 = vpop.f32.mrb[0].mxu0
        %v328 = vadd.f32 %v253, %v327
        %v329 = vpop.f32.mrb[0].mxu0
        %330 = vdwg.mxu0
        %v331 = vmax.f32 %v328, 0.0
        %v332 = vld [vmem:[%s3] sm:$0xf]
        %v333 = vld [vmem:[%s4] sm:$0xf]
        %vm334 = vcmask 15360
        %v336 = vsel %vm334, %v332, 0
        %vm338 = vcmask 1041408
        %v340 = vsel %vm338, %v331, 0
        %342 = vmatprep.subr.mxu0 0.0
        %343 = vmatpush1.msra.mxu0 %v340
        %344 = vmatprep.subr.mxu0 0.0
        %345 = vmatpush1.msra.mxu0 0.0
        %346 = vmatprep.subr.mxu0 0.0
        %347 = vmatpush1.msra.mxu0 0.0
        %348 = vmatprep.subr.mxu0 0.0
        %349 = vmatpush1.msra.mxu0 0.0
        %350 = vmatprep.subr.mxu0 0.0
        %351 = vmatpush1.msra.mxu0 0.0
        %352 = vmatprep.subr.mxu0 0.0
        %353 = vmatpush1.msra.mxu0 0.0
        %354 = vmatprep.subr.mxu0 0.0
        %355 = vmatpush1.msra.mxu0 0.0
        %356 = vmatprep.subr.mxu0 0.0
        %357 = vmatpush1.msra.mxu0 0.0
        %358 = vmatprep.subr.mxu0 0.0
        %359 = vmatpush1.msra.mxu0 0.0
        %360 = vmatprep.subr.mxu0 0.0
        %361 = vmatpush1.msra.mxu0 0.0
        %362 = vmatprep.subr.mxu0 0.0
        %363 = vmatpush1.msra.mxu0 0.0
        %364 = vmatprep.subr.mxu0 0.0
        %365 = vmatpush1.msra.mxu0 0.0
        %366 = vmatprep.subr.mxu0 0.0
        %367 = vmatpush1.msra.mxu0 0.0
        %368 = vmatprep.subr.mxu0 0.0
        %369 = vmatpush1.msra.mxu0 0.0
        %370 = vmatprep.subr.mxu0 0.0
        %371 = vmatpush1.msra.mxu0 0.0
        %372 = vmatprep.subr.mxu0 0.0
        %373 = vmatpush1.msra.mxu0 0.0
        %374 = vmatprep.subr.mxu0 0.0
        %375 = vmatpush1.msra.mxu0 0.0
        %376 = vmatprep.subr.mxu0 0.0
        %377 = vmatpush1.msra.mxu0 0.0
        %378 = vmatprep.subr.mxu0 0.0
        %379 = vmatpush1.msra.mxu0 0.0
        %380 = vmatprep.subr.mxu0 0.0
        %381 = vmatpush1.msra.mxu0 0.0
        %382 = vmatprep.subr.mxu0 0.0
        %383 = vmatpush1.msra.mxu0 0.0
        %384 = vmatprep.subr.mxu0 0.0
        %385 = vmatpush1.msra.mxu0 0.0
        %386 = vmatprep.subr.mxu0 0.0
        %387 = vmatpush1.msra.mxu0 0.0
        %388 = vmatprep.subr.mxu0 0.0
        %389 = vmatpush1.msra.mxu0 0.0
        %390 = vmatprep.subr.mxu0 0.0
        %391 = vmatpush1.msra.mxu0 0.0
        %392 = vmatprep.subr.mxu0 0.0
        %393 = vmatpush1.msra.mxu0 0.0
        %394 = vmatprep.subr.mxu0 0.0
        %395 = vmatpush1.msra.mxu0 0.0
        %396 = vmatprep.subr.mxu0 0.0
        %397 = vmatpush1.msra.mxu0 0.0
        %398 = vmatprep.subr.mxu0 0.0
        %399 = vmatpush1.msra.mxu0 0.0
        %400 = vmatprep.subr.mxu0 0.0
        %401 = vmatpush1.msra.mxu0 0.0
        %402 = vmatprep.subr.mxu0 0.0
        %403 = vmatpush1.msra.mxu0 0.0
        %404 = vmatprep.subr.mxu0 0.0
        %405 = vmatpush1.msra.mxu0 0.0
        %406 = vmatprep.mubr.f32.mxu0 0.0
        %407 = vmatmul.mubr.f32.gmra.mrb[0].mxu0 %v336
        %v408 = vpop.f32.mrb[0].mxu0
        %v409 = vadd.f32 %v333, %v408
        %v410 = vpop.f32.mrb[0].mxu0
        %411 = vdwg.mxu0
        %v412 = vxor.u32 %v409, 2147483648
        %v413 = vmul.f32 %v412, 1.442695
        %v414 = vpow.pop %v413
        %v415 = vadd.f32 %v414, 1.0
        %v416 = vrcp.pop %v415
        %v417 = vmul.f32 1.0, %v416
        %419 = vset.pattern.permute.xlu0 0
        %420 = vperm.xlu0 %419, %v417
        %v421 = vpop.permute.xlu0 %420
        %v423 = vunpack.c.l.s4 839922192
        %v424 = vunpack.c.0.s8 %v423
        %v425 = vlaneseq
        %v426 = vshrl.u32 %v425, 7
        %v427 = vsub.s32 %v424, %v426
        %v428 = vrot.slane %v421, %v427
        %v430 = vmul.f32 %v241, %v428
        %431 = vst [vmem:[%s240] sm:$0xff] %v430
        %s432 = sand.u32 %s140, 1
        %s433 = scalar_lea.sflag [#allocation4], %s432
        %s434 = sand.u32 %s140, 1
        %s435 = smul.addr %s434, 8
        %s436 = scalar_lea.vmem [#allocation5], %s435
        // Predicated region
        $region45: #{tpu_custom_call.1} parent=39 // pred_check
          %p437 = pneg %p150
        $region46: #{tpu_custom_call.1} parent=39 // pred_check_branch
          %439 = sbr.rel (%p437) target = $region48
        $region47: #{tpu_custom_call.1} parent=39 // pred_region
          %s441 = ssub.s32 128, 128
          %442 = vsyncadd %s433, %s441
          %s443 = smul.addr %s22, 2
          %s444 = smul.addr %s443, 64
          %s445 = scalar_lea.hbm %s5, %s444
          %s447 = sshll.u32 %s436, 4
          %s448 = int_to_ptr.vmem [resolvable:$true] %s447
          %450 = dma.vmem_to_hbm [thread:$0]  %s448, 128, %s445, %s433
        $region48: #{tpu_custom_call.1} parent=39 // pred_fallthru
          _
      $region40: #{tpu_custom_call.1} parent=5 // pred_fallthru
        _
      %p451 = scmp.le.s32.totalorder 2, %s17
      // Predicated region
      $region49: #{tpu_custom_call.1} parent=5 // pred_check
        %p452 = pneg %p451
      $region50: #{tpu_custom_call.1} parent=5 // pred_check_branch
        %454 = sbr.rel (%p452) target = $region52
      $region51: #{tpu_custom_call.1} parent=5 // pred_region
        %s455 = ssub.s32 %s17, 2
        // Predicated region
        $region53: #{tpu_custom_call.1} parent=51 // pred_check
          %p456 = pneg %p156
        $region54: #{tpu_custom_call.1} parent=51 // pred_check_branch
          %458 = sbr.rel (%p456) target = $region56
        $region55: #{tpu_custom_call.1} parent=51 // pred_region
          %s459 = sand.u32 %s141, 1
          %s460 = scalar_lea.sflag [#allocation4], %s459
          %s461 = sand.u32 %s141, 1
          %s462 = smul.addr %s461, 8
          %s463 = scalar_lea.vmem [#allocation5], %s462
          %464 = dma.done %s460, 128
        $region56: #{tpu_custom_call.1} parent=51 // pred_fallthru
          _
      $region52: #{tpu_custom_call.1} parent=5 // pred_fallthru
        _
    $region6: #{tpu_custom_call.1} parent=1 // loop_footer
      %s21 = sadd.s32 1, %s17
    $region7: #{tpu_custom_call.1} parent=1 // loop_footer_branch
      %16 = sbr.rel target = $region3
    $region8: #{tpu_custom_call.1} parent=1 // loop_exit
      _
    %465 = vsyncpa [#allocation3], 1
    %s466 = scalar_lea.sflag [#allocation3], 1
    %467 = vsyncpa %s466, 1
    %468 = vsyncpa [#allocation4], 1
    %s469 = scalar_lea.sflag [#allocation4], 1
    %470 = vsyncpa %s469, 1

</llo_original>
